<compile_context>
chip_gen: v7x
topology: tpu7x:2x2x1
jax: 0.10.0
libtpu: 0.0.40
codegen_flags: <defaults>
</compile_context>

<pallas_src>
import jax
import jax.numpy as jnp
from jax.experimental import pallas as pl
from jax.experimental.pallas import tpu as pltpu


def make_ray_dir_kernel(tile_rows, w_pad):
    """Build the Pallas kernel closed over static tile geometry."""

    def ray_dir_kernel(cam_ref, d_ref):
        # cam_ref: SMEM f32[13] = [inv_fx, -inv_fy, ox, oy, R00..R02, R10..R12, R20..R22]
        # d_ref  : VMEM f32[3, tile_rows, w_pad] world-space unit direction planes (SoA).
        inv_fx = cam_ref[0]
        neg_inv_fy = cam_ref[1]
        ox = cam_ref[2]
        oy = cam_ref[3]

        # Pixel coordinates: lane-axis iota for x, sublane-axis iota + row offset for y.
        # TODO(synk): a native float32 iota would drop the two int->f32 converts per vreg;
        # int32 iota + convert is kept for guaranteed Mosaic lowering.
        row0 = (pl.program_id(0) * tile_rows).astype(jnp.float32)
        px = jax.lax.broadcasted_iota(jnp.int32, (tile_rows, w_pad), 1).astype(jnp.float32)
        py = jax.lax.broadcasted_iota(jnp.int32, (tile_rows, w_pad), 0).astype(jnp.float32) + row0

        # Camera-space pinhole directions (+0.5 pixel center, -z forward; dz = -1 folded below).
        dx = px * inv_fx + ox
        dy = py * neg_inv_fy + oy

        # Rotate into world space: d_world[r] = R[r,0]*dx + R[r,1]*dy + R[r,2]*dz, dz = -1.
        dw = []
        for r in range(3):
            a = cam_ref[4 + 3 * r + 0]
            b = cam_ref[4 + 3 * r + 1]
            c = cam_ref[4 + 3 * r + 2]
            dw.append(a * dx + b * dy - c)

        # Normalize (rsqrt on the EUP).
        inv_norm = jax.lax.rsqrt(dw[0] * dw[0] + dw[1] * dw[1] + dw[2] * dw[2])

        d_ref[0, :, :] = dw[0] * inv_norm
        d_ref[1, :, :] = dw[1] * inv_norm
        d_ref[2, :, :] = dw[2] * inv_norm

    return ray_dir_kernel


def _round_up(x, m):
    return -(-x // m) * m


def _choose_tile_rows(H, w_pad, target_bytes=4 << 20):
    """Rows per grid step.

    Constraints / preferences (in order):
      * multiple of 8 (sublane tiling) and an exact divisor of the 8-padded height
        (no tail block, no wasted padded-row writeback, no post-kernel row slice),
      * one (3, rows, w_pad) f32 output block ~target_bytes (HBM-write-bound, not
        grid-step-overhead-bound),
      * an even number of grid steps when it costs <= 2x in tile size (v7x: 2 TCs).
    """
    h8 = _round_up(H, 8)
    units = h8 // 8
    bytes_per_unit = 3 * 8 * w_pad * 4
    target_units = max(1, target_bytes // bytes_per_unit)
    divisors = [d for d in range(1, units + 1) if units % d == 0]
    fitting = [d for d in divisors if d <= target_units] or [1]
    best = max(fitting)
    even_steps = [d for d in fitting if (units // d) % 2 == 0 and 2 * d >= best]
    if even_steps:
        best = max(even_steps)
    return best * 8, h8


def datamanager_next_image(image_hwc, c2w, intrinsics):
    """Pallas-backed equivalent of DataManager.next_eval_image's ray generation.

    Args:
      image_hwc:  f32[H, W, 3] ground-truth image.
      c2w:        f32[3, 4]    camera-to-world matrix (rotation | translation).
      intrinsics: f32[4]       [fx, fy, cx, cy]  (W/H are taken from the image shape).
    Returns:
      origins    f32[3]        constant camera origin (broadcast lazily by consumers),
      directions f32[3, H, W]  SoA world-space unit ray directions,
      gt_rgb     f32[H, W, 3]  ground-truth pixel batch (pass-through, no kernel traffic).
    """
    H, W, C = image_hwc.shape
    assert C == 3

    fx, fy, cx, cy = intrinsics[0], intrinsics[1], intrinsics[2], intrinsics[3]
    inv_fx = 1.0 / fx
    inv_fy = 1.0 / fy
    cam = jnp.concatenate(
        [
            jnp.stack([inv_fx, -inv_fy, (0.5 - cx) * inv_fx, (cy - 0.5) * inv_fy]),
            c2w[:, :3].reshape(-1),
        ]
    ).astype(jnp.float32)  # f32[13], 1-D SMEM (pads to only 64 B)

    w_pad = _round_up(W, 128)                 # lane-dense full-width stores
    tile_rows, h_pad = _choose_tile_rows(H, w_pad)
    grid = (h_pad // tile_rows,)
    block_bytes = 3 * tile_rows * w_pad * 4
    vmem_limit = int(2 * block_bytes + (4 << 20))  # double-buffered output + headroom

    dirs = pl.pallas_call(
        make_ray_dir_kernel(tile_rows, w_pad),
        out_shape=jax.ShapeDtypeStruct((3, h_pad, w_pad), jnp.float32),
        grid_spec=pltpu.PrefetchScalarGridSpec(
            num_scalar_prefetch=0,
            grid=grid,
            in_specs=[pl.BlockSpec(memory_space=pltpu.SMEM)],      # packed camera scalars
            out_specs=pl.BlockSpec((3, tile_rows, w_pad), lambda i: (0, i, 0)),
        ),
        compiler_params=pltpu.CompilerParams(
            dimension_semantics=("parallel",),
            vmem_limit_bytes=vmem_limit,
        ),
    )(cam)

    if h_pad != H or w_pad != W:
        dirs = dirs[:, :H, :W]    # only pays a slice copy for awkward H/W

    origins = c2w[:, 3]           # constant per camera; broadcast lazily downstream
    gt_rgb = image_hwc            # GT batch pass-through (pure metadata, no reshape)
    return origins, dirs, gt_rgb


def ray_bundle_aos(origins, directions_soa):
    """Compat helper: (N,3) AoS origins/directions for legacy consumers.
    Note: this transpose is a full HBM round trip — prefer consuming SoA (3,H,W)."""
    _, H, W = directions_soa.shape
    d = directions_soa.reshape(3, H * W).T
    o = jnp.broadcast_to(origins, d.shape)
    return o, d


def _reference(image_hwc, c2w, intrinsics):
    H, W, _ = image_hwc.shape
    fx, fy, cx, cy = intrinsics[0], intrinsics[1], intrinsics[2], intrinsics[3]
    ys, xs = jnp.meshgrid(jnp.arange(H, dtype=jnp.float32),
                          jnp.arange(W, dtype=jnp.float32), indexing="ij")
    dx = (xs + 0.5 - cx) / fx
    dy = -(ys + 0.5 - cy) / fy
    dz = -jnp.ones_like(dx)
    dcam = jnp.stack([dx, dy, dz], axis=-1).reshape(-1, 3)
    dw = dcam @ c2w[:, :3].T
    dw = dw / jnp.linalg.norm(dw, axis=-1, keepdims=True)
    origins = jnp.broadcast_to(c2w[:, 3], dw.shape)
    return origins, dw, image_hwc.reshape(-1, 3)


if __name__ == "__main__":
    key = jax.random.PRNGKey(0)
    # Small but lane-dense demo: W a multiple of 128 keeps the full-width vst path,
    # H=16 yields a 2-step grid (both v7x TensorCores get work).
    H, W = 16, 128

    k_img, _ = jax.random.split(key)
    image = jax.random.uniform(k_img, (H, W, 3), dtype=jnp.float32)

    # Deterministic camera: small rotation + translation, simple pinhole intrinsics.
    angle = 0.3
    c, s = jnp.cos(angle), jnp.sin(angle)
    R = jnp.array([[c, 0.0, s],
                   [0.0, 1.0, 0.0],
                   [-s, 0.0, c]], dtype=jnp.float32)
    t = jnp.array([[0.5], [-0.25], [1.0]], dtype=jnp.float32)
    c2w = jnp.concatenate([R, t], axis=1)  # (3, 4)

    fx = fy = float(W)  # focal length in pixels
    intrinsics = jnp.array([fx, fy, W / 2.0, H / 2.0], dtype=jnp.float32)

    origins, dirs_soa, gt = datamanager_next_image(image, c2w, intrinsics)
    jax.block_until_ready((origins, dirs_soa, gt))

    # Test-only AoS view for comparison against the reference.
    o_aos, d_aos = ray_bundle_aos(origins, dirs_soa)
    ro, rd, rrgb = _reference(image, c2w, intrinsics)
    assert jnp.allclose(o_aos, ro, atol=1e-5)
    assert jnp.allclose(d_aos, rd, atol=1e-5)
    assert jnp.allclose(gt.reshape(-1, 3), rrgb, atol=1e-6)

    print("KERNEL_OK")
</pallas_src>

<mosaic_0001>
module attributes {stable_mosaic.version = 11 : i64} {
  func.func @ray_dir_kernel(%arg0: i32, %arg1: memref<13xf32, #tpu.memory_space<smem>>, %arg2: memref<3x8x128xf32, #tpu.memory_space<vmem>>) attributes {dimension_semantics = [#tpu.dimension_semantics<parallel>], iteration_bounds = array<i64: 2>, scalar_prefetch = 0 : i64, scratch_operands = 0 : i64, tpu.core_type = #tpu.core_type<tc>, window_params = [{transform_indices = @transform_0, window_bounds = array<i64: 13>}, {transform_indices = @transform_1, window_bounds = array<i64: 3, 8, 128>}]} {
    %c0 = arith.constant 0 : index
    %0 = memref.load %arg1[%c0] : memref<13xf32, #tpu.memory_space<smem>>
    %c1 = arith.constant 1 : index
    %1 = memref.load %arg1[%c1] : memref<13xf32, #tpu.memory_space<smem>>
    %c2 = arith.constant 2 : index
    %2 = memref.load %arg1[%c2] : memref<13xf32, #tpu.memory_space<smem>>
    %c3 = arith.constant 3 : index
    %3 = memref.load %arg1[%c3] : memref<13xf32, #tpu.memory_space<smem>>
    %c8_i32 = arith.constant 8 : i32
    %4 = arith.muli %arg0, %c8_i32 : i32
    %5 = arith.sitofp %4 : i32 to f32
    %6 = tpu.iota {dimensions = array<i32: 1>} : vector<8x128xi32>
    %7 = arith.sitofp %6 : vector<8x128xi32> to vector<8x128xf32>
    %8 = tpu.iota {dimensions = array<i32: 0>} : vector<8x128xi32>
    %9 = arith.sitofp %8 : vector<8x128xi32> to vector<8x128xf32>
    %10 = vector.broadcast %5 : f32 to vector<8x128xf32>
    %11 = arith.addf %9, %10 : vector<8x128xf32>
    %12 = vector.broadcast %0 : f32 to vector<8x128xf32>
    %13 = arith.mulf %7, %12 : vector<8x128xf32>
    %14 = vector.broadcast %2 : f32 to vector<8x128xf32>
    %15 = arith.addf %13, %14 : vector<8x128xf32>
    %16 = vector.broadcast %1 : f32 to vector<8x128xf32>
    %17 = arith.mulf %11, %16 : vector<8x128xf32>
    %18 = vector.broadcast %3 : f32 to vector<8x128xf32>
    %19 = arith.addf %17, %18 : vector<8x128xf32>
    %c4 = arith.constant 4 : index
    %20 = memref.load %arg1[%c4] : memref<13xf32, #tpu.memory_space<smem>>
    %c5 = arith.constant 5 : index
    %21 = memref.load %arg1[%c5] : memref<13xf32, #tpu.memory_space<smem>>
    %c6 = arith.constant 6 : index
    %22 = memref.load %arg1[%c6] : memref<13xf32, #tpu.memory_space<smem>>
    %23 = vector.broadcast %20 : f32 to vector<8x128xf32>
    %24 = arith.mulf %23, %15 : vector<8x128xf32>
    %25 = vector.broadcast %21 : f32 to vector<8x128xf32>
    %26 = arith.mulf %25, %19 : vector<8x128xf32>
    %27 = arith.addf %24, %26 : vector<8x128xf32>
    %28 = vector.broadcast %22 : f32 to vector<8x128xf32>
    %29 = arith.subf %27, %28 : vector<8x128xf32>
    %c7 = arith.constant 7 : index
    %30 = memref.load %arg1[%c7] : memref<13xf32, #tpu.memory_space<smem>>
    %c8 = arith.constant 8 : index
    %31 = memref.load %arg1[%c8] : memref<13xf32, #tpu.memory_space<smem>>
    %c9 = arith.constant 9 : index
    %32 = memref.load %arg1[%c9] : memref<13xf32, #tpu.memory_space<smem>>
    %33 = vector.broadcast %30 : f32 to vector<8x128xf32>
    %34 = arith.mulf %33, %15 : vector<8x128xf32>
    %35 = vector.broadcast %31 : f32 to vector<8x128xf32>
    %36 = arith.mulf %35, %19 : vector<8x128xf32>
    %37 = arith.addf %34, %36 : vector<8x128xf32>
    %38 = vector.broadcast %32 : f32 to vector<8x128xf32>
    %39 = arith.subf %37, %38 : vector<8x128xf32>
    %c10 = arith.constant 10 : index
    %40 = memref.load %arg1[%c10] : memref<13xf32, #tpu.memory_space<smem>>
    %c11 = arith.constant 11 : index
    %41 = memref.load %arg1[%c11] : memref<13xf32, #tpu.memory_space<smem>>
    %c12 = arith.constant 12 : index
    %42 = memref.load %arg1[%c12] : memref<13xf32, #tpu.memory_space<smem>>
    %43 = vector.broadcast %40 : f32 to vector<8x128xf32>
    %44 = arith.mulf %43, %15 : vector<8x128xf32>
    %45 = vector.broadcast %41 : f32 to vector<8x128xf32>
    %46 = arith.mulf %45, %19 : vector<8x128xf32>
    %47 = arith.addf %44, %46 : vector<8x128xf32>
    %48 = vector.broadcast %42 : f32 to vector<8x128xf32>
    %49 = arith.subf %47, %48 : vector<8x128xf32>
    %50 = arith.mulf %29, %29 : vector<8x128xf32>
    %51 = arith.mulf %39, %39 : vector<8x128xf32>
    %52 = arith.addf %50, %51 : vector<8x128xf32>
    %53 = arith.mulf %49, %49 : vector<8x128xf32>
    %54 = arith.addf %52, %53 : vector<8x128xf32>
    %55 = math.rsqrt %54 : vector<8x128xf32>
    %56 = arith.mulf %29, %55 : vector<8x128xf32>
    %c0_0 = arith.constant 0 : index
    %c0_1 = arith.constant 0 : index
    %c0_2 = arith.constant 0 : index
    %57 = vector.load %arg2[%c0_0, %c0_1, %c0_2] : memref<3x8x128xf32, #tpu.memory_space<vmem>>, vector<1x8x128xf32>
    %58 = vector.shape_cast %57 : vector<1x8x128xf32> to vector<8x128xf32>
    %59 = vector.shape_cast %56 : vector<8x128xf32> to vector<1x8x128xf32>
    tpu.vector_store %arg2[%c0_0, %c0_1, %c0_2], %59 {strides = array<i32>} : memref<3x8x128xf32, #tpu.memory_space<vmem>>, vector<1x8x128xf32>,
    %60 = arith.mulf %39, %55 : vector<8x128xf32>
    %c1_3 = arith.constant 1 : index
    %c0_4 = arith.constant 0 : index
    %c0_5 = arith.constant 0 : index
    %61 = vector.load %arg2[%c1_3, %c0_4, %c0_5] : memref<3x8x128xf32, #tpu.memory_space<vmem>>, vector<1x8x128xf32>
    %62 = vector.shape_cast %61 : vector<1x8x128xf32> to vector<8x128xf32>
    %63 = vector.shape_cast %60 : vector<8x128xf32> to vector<1x8x128xf32>
    tpu.vector_store %arg2[%c1_3, %c0_4, %c0_5], %63 {strides = array<i32>} : memref<3x8x128xf32, #tpu.memory_space<vmem>>, vector<1x8x128xf32>,
    %64 = arith.mulf %49, %55 : vector<8x128xf32>
    %c2_6 = arith.constant 2 : index
    %c0_7 = arith.constant 0 : index
    %c0_8 = arith.constant 0 : index
    %65 = vector.load %arg2[%c2_6, %c0_7, %c0_8] : memref<3x8x128xf32, #tpu.memory_space<vmem>>, vector<1x8x128xf32>
    %66 = vector.shape_cast %65 : vector<1x8x128xf32> to vector<8x128xf32>
    %67 = vector.shape_cast %64 : vector<8x128xf32> to vector<1x8x128xf32>
    tpu.vector_store %arg2[%c2_6, %c0_7, %c0_8], %67 {strides = array<i32>} : memref<3x8x128xf32, #tpu.memory_space<vmem>>, vector<1x8x128xf32>,
    return
  }
  func.func @transform_0(%arg0: i32) -> i32 {
    %c0_i32 = arith.constant 0 : i32
    %c0_i32_0 = arith.constant 0 : i32
    return %c0_i32 : i32
  }
  func.func @transform_1(%arg0: i32) -> (i32, i32, i32) {
    %c0_i32 = arith.constant 0 : i32
    %c0_i32_0 = arith.constant 0 : i32
    %c0_i32_1 = arith.constant 0 : i32
    return %c0_i32, %arg0, %c0_i32_0 : i32, i32, i32
  }
}

</mosaic_0001>

<llo_original>
// kernel: tpu_custom_call.1
$region0: #{tpu_custom_call.1}
  #allocation0 [shape = 'u32[]', space=smem, size = 0x4, offset = 0x4, fixed_abs, tag = 'smem constant byte address 0x4 - core index']
  #allocation1 [shape = 'u32[144,128]{1,0:T(1,128)}', space=vmem, size = 0x12000, scoped, tag = 'internal scratch']
  %s0 = inlined_call_operand.hbm [shape: f32[13], index: 0, kind: input, shape index: {}]
  %s1 = inlined_call_operand.hbm [shape: f32[3,16,128], index: 1, kind: output, shape index: {}]
  %s2 = sld [smem:[#allocation0]]
  $region41: #{tpu_custom_call.1} parent=0
    _
  %s4 = ssub.s32 1, %s2
  %s5 = scalar_select 0, %s4, %s2
  $region1: #{tpu_custom_call.1} parent=0
    #allocation2 [shape = 'u8[512]{0}', space=smem, size = 0x200, scoped, tag = 'input window, operand 0, single buffered']
    #allocation3 [shape = 's32[2]{0}', space=sflag, size = 0x8, scoped, tag = 'scoped memory for tpu_custom_call.1']
    #allocation4 [shape = 's32[2]{0}', space=sflag, size = 0x8, scoped, tag = 'scoped memory for tpu_custom_call.1']
    #allocation5 [shape = 'u8[24576]{0}', space=vmem, size = 0x6000, scoped, tag = 'output window, operand 0']
    %6 = vsyncpa [#allocation4], 0
    %7 = vsyncpa [#allocation3], 0
    %s8 = scalar_lea.sflag [#allocation3], 1
    %9 = vsyncpa %s8, 0
    loop: start=0, step=1, limit=4
    $region2: #{tpu_custom_call.1} parent=1 // loop_pre_header
      _
    $region3: #{tpu_custom_call.1} parent=1 // loop_header
      %s11 = sphi 0, %s15
      %p12 = scmp.ge.s32.totalorder %s11, 4
      %s19 = sphi 0, %s19
      %s21 = sphi 0, %s19
      %s22 = sphi 0, %s21
      %s36 = sphi 0, %s22
      %s42 = sphi 0, %s44
      %s45 = sphi 0, %s42
      %s46 = sphi 0, %s45
      %s62 = sphi 0, %s46
    $region4: #{tpu_custom_call.1} parent=1 // loop_header_branch
      %14 = sbr.rel (%p12) target = $region8
    $region5: #{tpu_custom_call.1} parent=1 // loop_body
      %s16 = ssub.s32 %s11, 1
      %s17 = ssub.s32 %s11, 2
      %s18 = sadd.s32 %s11, 1
      %s20 = sadd.s32 %s19, 1
      %p23 = scmp.eq.s32.totalorder %s11, 1
      %p24 = scmp.ne.s32.totalorder %s19, %s21
      %p25 = scmp.eq.s32.totalorder %s11, 0
      %p26 = por %p24, %p25
      %p27 = scmp.ne.s32.totalorder %s19, %s21
      %p28 = scmp.eq.s32.totalorder %s16, 1
      %p29 = por %p27, %p28
      %p30 = scmp.ne.s32.totalorder %s21, %s22
      %p31 = scmp.eq.s32.totalorder %s16, 0
      %p32 = por %p30, %p31
      %p33 = scmp.ne.s32.totalorder %s21, %s22
      %p34 = scmp.eq.s32.totalorder %s17, 1
      %p35 = por %p33, %p34
      %p37 = scmp.ne.s32.totalorder %s22, %s36
      %p38 = scmp.eq.s32.totalorder %s17, 0
      %p39 = por %p37, %p38
      %s40 = ssub.s32 %s11, %s18
      %p41 = scmp.eq.s32.totalorder %s40, 0
      %s43 = sadd.s32 %s42, 1
      %s44 = scalar_select %p41, %s42, %s43
      %p47 = pneg %p41
      %p48 = scmp.eq.s32.totalorder %s11, 1
      %p49 = por %p47, %p48
      %p50 = scmp.ne.s32.totalorder %s42, %s45
      %p51 = scmp.eq.s32.totalorder %s11, 0
      %p52 = por %p50, %p51
      %p53 = scmp.ne.s32.totalorder %s42, %s45
      %p54 = scmp.eq.s32.totalorder %s16, 1
      %p55 = por %p53, %p54
      %p56 = scmp.ne.s32.totalorder %s45, %s46
      %p57 = scmp.eq.s32.totalorder %s16, 0
      %p58 = por %p56, %p57
      %p59 = scmp.ne.s32.totalorder %s45, %s46
      %p60 = scmp.eq.s32.totalorder %s17, 1
      %p61 = por %p59, %p60
      %p63 = scmp.ne.s32.totalorder %s46, %s62
      %p64 = scmp.eq.s32.totalorder %s17, 0
      %p65 = por %p63, %p64
      %p66 = scmp.le.s32.totalorder 1, %s11
      %p67 = scmp.lt.s32.totalorder %s11, 3
      %p68 = pnand %p66, %p67
      %p69 = pneg %p68
      // Predicated region
      $region9: #{tpu_custom_call.1} parent=5 // pred_check
        _
      $region10: #{tpu_custom_call.1} parent=5 // pred_check_branch
        %71 = sbr.rel (%p68) target = $region12
      $region11: #{tpu_custom_call.1} parent=5 // pred_region
        %s72 = ssub.s32 %s11, 1
        // Predicated region
        $region13: #{tpu_custom_call.1} parent=11 // pred_check
          %p73 = pneg %p32
        $region14: #{tpu_custom_call.1} parent=11 // pred_check_branch
          %75 = sbr.rel (%p73) target = $region16
        $region15: #{tpu_custom_call.1} parent=11 // pred_region
          %s77 = ssub.s32 16, 16
          %78 = vsyncadd [#allocation4], %s77
          %81 = dma.hbm_to_smem %s0, 16, [#allocation2], [#allocation4]
        $region16: #{tpu_custom_call.1} parent=11 // pred_fallthru
          _
      $region12: #{tpu_custom_call.1} parent=5 // pred_fallthru
        _
      %p82 = scmp.lt.s32.totalorder %s11, 2
      // Predicated region
      $region17: #{tpu_custom_call.1} parent=5 // pred_check
        %p83 = pneg %p82
      $region18: #{tpu_custom_call.1} parent=5 // pred_check_branch
        %85 = sbr.rel (%p83) target = $region20
      $region19: #{tpu_custom_call.1} parent=5 // pred_region
        _
      $region20: #{tpu_custom_call.1} parent=5 // pred_fallthru
        _
      %p86 = scmp.le.s32.totalorder 1, %s11
      %p87 = scmp.lt.s32.totalorder %s11, 3
      %p88 = pnand %p86, %p87
      %p89 = pneg %p88
      // Predicated region
      $region21: #{tpu_custom_call.1} parent=5 // pred_check
        _
      $region22: #{tpu_custom_call.1} parent=5 // pred_check_branch
        %91 = sbr.rel (%p88) target = $region24
      $region23: #{tpu_custom_call.1} parent=5 // pred_region
        %s92 = ssub.s32 %s11, 1
        // Predicated region
        $region25: #{tpu_custom_call.1} parent=23 // pred_check
          %p93 = pneg %p32
        $region26: #{tpu_custom_call.1} parent=23 // pred_check_branch
          %95 = sbr.rel (%p93) target = $region28
        $region27: #{tpu_custom_call.1} parent=23 // pred_region
          %96 = dma.done [#allocation4], 16
        $region28: #{tpu_custom_call.1} parent=23 // pred_fallthru
          _
        %97 = sfence
        %p98 = pneg %p32
        %p99 = pneg %p29
        %p100 = pneg %p58
        %p101 = pneg %p55
        %s102 = sand.u32 %s45, 1
        %s103 = scalar_lea.sflag [#allocation3], %s102
        %s104 = sand.u32 %s45, 1
        %s105 = smul.addr %s104, 24
        %s106 = scalar_lea.vmem [#allocation5], %s105
        %s107 = sld [smem:[#allocation2]]
        %s108 = sld [smem:[#allocation2 + $0x1]]
        %s109 = sld [smem:[#allocation2 + $0x2]]
        %s110 = sld [smem:[#allocation2 + $0x3]]
        %s111 = smul.u32 %s16, 8
        %s112 = scvt.s32.f32 %s111
        %v113 = vlaneseq
        %v114 = vand.u32 %v113, 127
        %v115 = vcvt.s32.f32 %v114
        %v116 = vlaneseq
        %v117 = vshrl.u32 %v116, 7
        %v118 = vcvt.s32.f32 %v117
        %v119 = vstv %s112
        %v120 = vadd.f32 %v118, %v119
        %v121 = vstv %s107
        %v122 = vmul.f32 %v115, %v121
        %v123 = vstv %s109
        %v124 = vadd.f32 %v122, %v123
        %v125 = vstv %s108
        %v126 = vmul.f32 %v120, %v125
        %v127 = vstv %s110
        %v128 = vadd.f32 %v126, %v127
        %s129 = sld [smem:[#allocation2 + $0x4]]
        %s130 = sld [smem:[#allocation2 + $0x5]]
        %s131 = sld [smem:[#allocation2 + $0x6]]
        %v132 = vstv %s129
        %v133 = vmul.f32 %v132, %v124
        %v134 = vstv %s130
        %v135 = vmul.f32 %v134, %v128
        %v136 = vadd.f32 %v133, %v135
        %v137 = vstv %s131
        %v138 = vsub.f32 %v136, %v137
        %s139 = sld [smem:[#allocation2 + $0x7]]
        %s140 = sld [smem:[#allocation2 + $0x8]]
        %s141 = sld [smem:[#allocation2 + $0x9]]
        %v142 = vstv %s139
        %v143 = vmul.f32 %v142, %v124
        %v144 = vstv %s140
        %v145 = vmul.f32 %v144, %v128
        %v146 = vadd.f32 %v143, %v145
        %v147 = vstv %s141
        %v148 = vsub.f32 %v146, %v147
        %s149 = sld [smem:[#allocation2 + $0xa]]
        %s150 = sld [smem:[#allocation2 + $0xb]]
        %s151 = sld [smem:[#allocation2 + $0xc]]
        %v152 = vstv %s149
        %v153 = vmul.f32 %v152, %v124
        %v154 = vstv %s150
        %v155 = vmul.f32 %v154, %v128
        %v156 = vadd.f32 %v153, %v155
        %v157 = vstv %s151
        %v158 = vsub.f32 %v156, %v157
        %v159 = vmul.f32 %v138, %v138
        %v160 = vmul.f32 %v148, %v148
        %v161 = vadd.f32 %v159, %v160
        %v162 = vmul.f32 %v158, %v158
        %v163 = vadd.f32 %v161, %v162
        %v164 = vrsqrt.pop %v163
        %v165 = vmul.f32 %v138, %v164
        %166 = vst [vmem:[%s106] sm:$0xff] %v165
        %v167 = vmul.f32 %v148, %v164
        %s168 = scalar_lea.vmem %s106, 8 [#allocation5]
        %169 = vst [vmem:[%s168] sm:$0xff] %v167
        %v170 = vmul.f32 %v158, %v164
        %s171 = scalar_lea.vmem %s106, 16 [#allocation5]
        %172 = vst [vmem:[%s171] sm:$0xff] %v170
        %s173 = sand.u32 %s45, 1
        %s174 = scalar_lea.sflag [#allocation3], %s173
        %s175 = sand.u32 %s45, 1
        %s176 = smul.addr %s175, 24
        %s177 = scalar_lea.vmem [#allocation5], %s176
        // Predicated region
        $region29: #{tpu_custom_call.1} parent=23 // pred_check
          %p178 = pneg %p55
        $region30: #{tpu_custom_call.1} parent=23 // pred_check_branch
          %180 = sbr.rel (%p178) target = $region32
        $region31: #{tpu_custom_call.1} parent=23 // pred_region
          %s182 = ssub.s32 384, 384
          %183 = vsyncadd %s174, %s182
          %s184 = smul.addr %s16, 128
          %s185 = scalar_lea.hbm %s1, %s184
          %s186 = sshll.u32 %s177, 4
          %s187 = int_to_ptr.vmem [resolvable:$true] %s186
          %192 = dma.vmem_to_hbm [thread:$0]  %s187, 384, %s185, %s174, 128, 256, 8
        $region32: #{tpu_custom_call.1} parent=23 // pred_fallthru
          _
      $region24: #{tpu_custom_call.1} parent=5 // pred_fallthru
        _
      %p193 = scmp.le.s32.totalorder 2, %s11
      // Predicated region
      $region33: #{tpu_custom_call.1} parent=5 // pred_check
        %p194 = pneg %p193
      $region34: #{tpu_custom_call.1} parent=5 // pred_check_branch
        %196 = sbr.rel (%p194) target = $region36
      $region35: #{tpu_custom_call.1} parent=5 // pred_region
        %s197 = ssub.s32 %s11, 2
        // Predicated region
        $region37: #{tpu_custom_call.1} parent=35 // pred_check
          %p198 = pneg %p61
        $region38: #{tpu_custom_call.1} parent=35 // pred_check_branch
          %200 = sbr.rel (%p198) target = $region40
        $region39: #{tpu_custom_call.1} parent=35 // pred_region
          %s201 = sand.u32 %s46, 1
          %s202 = scalar_lea.sflag [#allocation3], %s201
          %s203 = sand.u32 %s46, 1
          %s204 = smul.addr %s203, 24
          %s205 = scalar_lea.vmem [#allocation5], %s204
          %206 = dma.done %s202, 384
        $region40: #{tpu_custom_call.1} parent=35 // pred_fallthru
          _
      $region36: #{tpu_custom_call.1} parent=5 // pred_fallthru
        _
    $region6: #{tpu_custom_call.1} parent=1 // loop_footer
      %s15 = sadd.s32 1, %s11
    $region7: #{tpu_custom_call.1} parent=1 // loop_footer_branch
      %10 = sbr.rel target = $region3
    $region8: #{tpu_custom_call.1} parent=1 // loop_exit
      _
    %207 = vsyncpa [#allocation3], 1
    %s208 = scalar_lea.sflag [#allocation3], 1
    %209 = vsyncpa %s208, 1
    %210 = vsyncpa [#allocation4], 1
    %s211 = scalar_lea.sflag [#allocation4], 1
    %212 = vsyncpa %s211, 1

</llo_original>
